<compile_context>
chip_gen: v7x
topology: tpu7x:2x2x1
jax: 0.10.0
libtpu: 0.0.40
codegen_flags: <defaults>
</compile_context>

<pallas_src>
import functools

import jax
import jax.numpy as jnp
from jax.experimental import pallas as pl
from jax.experimental.pallas import tpu as pltpu


def _upsample_kernel(x_ref, w_ref, shift_ref, e_ref, o_ref, *,
                     band_rows, chunk_rows, width, negative_slope, compute_dtype):
    """One grid step = one batch sample x one band of `band_rows` input rows.

    x_ref     : (1, C_in, band_rows*W)     flattened input rows
    w_ref     : (C_out, C_in)              conv weight with BN scale folded (compute_dtype)
    shift_ref : (C_out, 1)                 folded BN shift (f32)
    e_ref     : (K, 4K), K = chunk_rows*W  0/1 nearest-upsample expansion (compute_dtype)
    o_ref     : (1, C_out, 4*band_rows*W)  flattened output rows
    """
    w = w_ref[...]             # (C_out, C_in); BN scale already folded in (wrapper)
    shift = shift_ref[...]     # (C_out, 1)

    done = 0
    while done < band_rows:                       # static python loop (small unroll)
        rc = min(chunk_rows, band_rows - done)    # rows in this chunk (last may be ragged)
        k = rc * width
        # 1x1 conv over the whole chunk: MXU sees N = rc*W lanes (>=128 when possible).
        xc = x_ref[0, :, done * width:(done + rc) * width].astype(compute_dtype)
        y = jnp.dot(w, xc, preferred_element_type=jnp.float32)      # (C_out, rc*W)
        y = y + shift                                               # folded BatchNorm shift
        y = jnp.where(y > 0, y, negative_slope * y)                 # LeakyReLU (VPU)
        # Nearest 2x upsample (H and W together) as one small 0/1 matmul producing
        # the flattened output layout: out[c, r*4W + i*2W + 2w + j] = y[c, r*W + w].
        e = e_ref[...] if rc == chunk_rows else e_ref[0:k, 0:4 * k]
        z = jnp.dot(y.astype(compute_dtype), e, preferred_element_type=jnp.float32)
        # Single lane-dense store per chunk (contiguous 4*rc*W lanes).
        o_ref[0, :, done * 4 * width:(done + rc) * 4 * width] = z.astype(o_ref.dtype)
        done += rc


def _pick_band(H, W, C_in, C_out, in_itemsize, out_itemsize, *,
               target_lanes=128, vmem_budget_bytes=24 * 1024 * 1024, max_chunks=32):
    """Pick (band_rows, chunk_rows): largest H-divisor band fitting the VMEM budget."""
    chunk_rows = max(1, -(-target_lanes // W))                    # ceil(128 / W)
    divisors = [d for d in range(1, H + 1) if H % d == 0]
    # BlockSpec legality: last dim of the input block (d*W) must be a multiple
    # of 128 or the full extent (d == H).
    legal = [d for d in divisors if d == H or (d * W) % 128 == 0]

    def band_bytes(d):
        in_b = C_in * d * W * in_itemsize
        out_b = C_out * 4 * d * W * out_itemsize
        return 2 * (in_b + out_b)                                 # double-buffered in + out

    fitting = [d for d in legal
               if band_bytes(d) <= vmem_budget_bytes
               and -(-d // chunk_rows) <= max_chunks]
    band_rows = max(fitting) if fitting else min(legal, key=band_bytes)
    chunk_rows = min(chunk_rows, band_rows)
    return band_rows, chunk_rows


def upsample_forward(x, conv_w, bn_gamma, bn_beta, bn_mean, bn_var, *,
                     eps=1e-5, negative_slope=0.01, compute_dtype=jnp.bfloat16):
    """Forward of Upsample(in_ch, out_ch): Conv1x1 -> BN -> LeakyReLU -> nearest 2x."""
    N, C_in, H, W = x.shape
    w2 = conv_w.reshape(conv_w.shape[0], -1)      # (C_out, C_in) from (C_out, C_in, 1, 1)
    C_out = w2.shape[0]
    assert w2.shape[1] == C_in

    # TODO(synk): BatchNorm2d is folded in inference mode (running stats);
    # training-mode batch statistics are not computed in-kernel.
    inv = bn_gamma.astype(jnp.float32) / jnp.sqrt(bn_var.astype(jnp.float32) + eps)
    w_scaled = (w2.astype(jnp.float32) * inv[:, None]).astype(compute_dtype)  # BN scale folded
    shift = (bn_beta.astype(jnp.float32)
             - bn_mean.astype(jnp.float32) * inv).reshape(C_out, 1)           # f32

    band_rows, chunk_rows = _pick_band(
        H, W, C_in, C_out,
        jnp.dtype(x.dtype).itemsize, jnp.dtype(x.dtype).itemsize)
    n_bands = H // band_rows

    # 0/1 expansion: e[r*W + w, r*4W + i*2W + 2w + j] = 1 for i, j in {0, 1}.
    # Right-multiplying a (C_out, K) chunk by e performs both the W and the H
    # nearest-neighbour duplication directly in the flattened output layout.
    K = chunk_rows * W
    s = jnp.arange(K)
    r_s, w_s = s // W, s % W
    t = jnp.arange(4 * K)
    r_t = t // (4 * W)
    w_t = (t % (2 * W)) // 2
    expand = ((r_s[:, None] == r_t[None, :]) &
              (w_s[:, None] == w_t[None, :])).astype(compute_dtype)

    x_flat = x.reshape(N, C_in, H * W)            # free reshape (row-major merge)

    kernel = functools.partial(
        _upsample_kernel,
        band_rows=band_rows, chunk_rows=chunk_rows, width=W,
        negative_slope=negative_slope, compute_dtype=compute_dtype)

    out_flat = pl.pallas_call(
        kernel,
        out_shape=jax.ShapeDtypeStruct((N, C_out, 4 * H * W), x.dtype),
        grid=(N, n_bands),
        in_specs=[
            pl.BlockSpec((1, C_in, band_rows * W), lambda n, hb: (n, 0, hb)),
            pl.BlockSpec((C_out, C_in), lambda n, hb: (0, 0)),
            pl.BlockSpec((C_out, 1), lambda n, hb: (0, 0)),
            pl.BlockSpec((K, 4 * K), lambda n, hb: (0, 0)),
        ],
        out_specs=pl.BlockSpec((1, C_out, 4 * band_rows * W), lambda n, hb: (n, 0, hb)),
        compiler_params=pltpu.CompilerParams(
            dimension_semantics=("parallel", "parallel"),
            vmem_limit_bytes=48 * 1024 * 1024),
    )(x_flat, w_scaled, shift, expand)

    # Free reshape back to NCHW: flat index = (2h+i)*2W + (2w+j) = h*4W + i*2W + 2w + j.
    return out_flat.reshape(N, C_out, 2 * H, 2 * W)


def upsample_reference(x, conv_w, bn_gamma, bn_beta, bn_mean, bn_var, *,
                       eps=1e-5, negative_slope=0.01):
    """Pure-JAX f32 reference of the same forward pass."""
    w2 = conv_w.reshape(conv_w.shape[0], -1).astype(jnp.float32)
    xf = x.astype(jnp.float32)
    y = jnp.einsum('oc,nchw->nohw', w2, xf)
    inv = bn_gamma / jnp.sqrt(bn_var + eps)
    y = y * inv[None, :, None, None] + (bn_beta - bn_mean * inv)[None, :, None, None]
    y = jnp.where(y > 0, y, negative_slope * y)
    y = jnp.repeat(jnp.repeat(y, 2, axis=2), 2, axis=3)
    return y.astype(x.dtype)


if __name__ == "__main__":
    key = jax.random.PRNGKey(0)
    kx, kw, kg, kb, km, kv = jax.random.split(key, 6)

    N, C_in, C_out, H, W = 2, 4, 8, 16, 16
    x = jax.random.normal(kx, (N, C_in, H, W), dtype=jnp.float32)
    conv_w = 0.5 * jax.random.normal(kw, (C_out, C_in, 1, 1), dtype=jnp.float32)
    bn_gamma = 1.0 + 0.1 * jax.random.normal(kg, (C_out,), dtype=jnp.float32)
    bn_beta = 0.1 * jax.random.normal(kb, (C_out,), dtype=jnp.float32)
    bn_mean = 0.1 * jax.random.normal(km, (C_out,), dtype=jnp.float32)
    bn_var = 1.0 + 0.1 * jax.random.uniform(kv, (C_out,), dtype=jnp.float32)

    y = upsample_forward(x, conv_w, bn_gamma, bn_beta, bn_mean, bn_var)
    y = jax.block_until_ready(y)

    y_ref = upsample_reference(x, conv_w, bn_gamma, bn_beta, bn_mean, bn_var)
    assert y.shape == (N, C_out, 2 * H, 2 * W)
    assert y.dtype == x.dtype
    # bf16 MXU operands -> slightly looser tolerance vs. the pure-f32 reference.
    assert jnp.allclose(y, y_ref, atol=5e-2, rtol=5e-2), \
        float(jnp.max(jnp.abs(y - y_ref)))

    print("KERNEL_OK")
</pallas_src>

<mosaic_0001>
module attributes {stable_mosaic.version = 11 : i64} {
  func.func @_upsample_kernel(%arg0: i32, %arg1: i32, %arg2: memref<1x4x256xf32, #tpu.memory_space<vmem>>, %arg3: memref<8x4xbf16, #tpu.memory_space<vmem>>, %arg4: memref<8x1xf32, #tpu.memory_space<vmem>>, %arg5: memref<128x512xbf16, #tpu.memory_space<vmem>>, %arg6: memref<1x8x1024xf32, #tpu.memory_space<vmem>>) attributes {dimension_semantics = [#tpu.dimension_semantics<parallel>, #tpu.dimension_semantics<parallel>], iteration_bounds = array<i64: 2, 1>, scalar_prefetch = 0 : i64, scratch_operands = 0 : i64, tpu.core_type = #tpu.core_type<tc>, window_params = [{transform_indices = @transform_0, window_bounds = array<i64: 1, 4, 256>}, {pipeline_mode = #tpu.pipeline_mode<synchronous>, transform_indices = @transform_1, window_bounds = array<i64: 8, 4>}, {pipeline_mode = #tpu.pipeline_mode<synchronous>, transform_indices = @transform_2, window_bounds = array<i64: 8, 1>}, {pipeline_mode = #tpu.pipeline_mode<synchronous>, transform_indices = @transform_3, window_bounds = array<i64: 128, 512>}, {transform_indices = @transform_4, window_bounds = array<i64: 1, 8, 1024>}]} {
    %c0 = arith.constant 0 : index
    %c0_0 = arith.constant 0 : index
    %0 = vector.load %arg3[%c0, %c0_0] : memref<8x4xbf16, #tpu.memory_space<vmem>>, vector<8x4xbf16>
    %c0_1 = arith.constant 0 : index
    %c0_2 = arith.constant 0 : index
    %1 = vector.load %arg4[%c0_1, %c0_2] : memref<8x1xf32, #tpu.memory_space<vmem>>, vector<8x1xf32>
    %c0_3 = arith.constant 0 : index
    %c0_4 = arith.constant 0 : index
    %c0_5 = arith.constant 0 : index
    %2 = vector.load %arg2[%c0_3, %c0_4, %c0_5] : memref<1x4x256xf32, #tpu.memory_space<vmem>>, vector<1x4x128xf32>
    %3 = vector.shape_cast %2 : vector<1x4x128xf32> to vector<4x128xf32>
    %4 = arith.truncf %3 : vector<4x128xf32> to vector<4x128xbf16>
    %cst = arith.constant dense<0.000000e+00> : vector<8x128xf32>
    %5 = tpu.matmul %0, %4, %cst {dimension_numbers = #tpu.dot_dimension_numbers<[1], [0], [0], [1], [0, 0, 1, 1], [], []>} : vector<8x4xbf16>, vector<4x128xbf16>, vector<8x128xf32> -> vector<8x128xf32>
    %6 = vector.broadcast %1 : vector<8x1xf32> to vector<8x128xf32>
    %7 = arith.addf %5, %6 : vector<8x128xf32>
    %cst_6 = arith.constant 0.000000e+00 : f32
    %8 = vector.broadcast %cst_6 : f32 to vector<8x128xf32>
    %9 = arith.cmpf ogt, %7, %8 : vector<8x128xf32>
    %cst_7 = arith.constant 0.00999999977 : f32
    %10 = vector.broadcast %cst_7 : f32 to vector<8x128xf32>
    %11 = arith.mulf %10, %7 : vector<8x128xf32>
    %12 = arith.select %9, %7, %11 : vector<8x128xi1>, vector<8x128xf32>
    %c0_8 = arith.constant 0 : index
    %c0_9 = arith.constant 0 : index
    %13 = vector.load %arg5[%c0_8, %c0_9] : memref<128x512xbf16, #tpu.memory_space<vmem>>, vector<128x512xbf16>
    %14 = arith.truncf %12 : vector<8x128xf32> to vector<8x128xbf16>
    %cst_10 = arith.constant dense<0.000000e+00> : vector<8x512xf32>
    %15 = tpu.matmul %14, %13, %cst_10 {dimension_numbers = #tpu.dot_dimension_numbers<[1], [0], [0], [1], [0, 0, 1, 1], [], []>} : vector<8x128xbf16>, vector<128x512xbf16>, vector<8x512xf32> -> vector<8x512xf32>
    %c0_11 = arith.constant 0 : index
    %c0_12 = arith.constant 0 : index
    %c0_13 = arith.constant 0 : index
    %16 = vector.load %arg6[%c0_11, %c0_12, %c0_13] : memref<1x8x1024xf32, #tpu.memory_space<vmem>>, vector<1x8x512xf32>
    %17 = vector.shape_cast %16 : vector<1x8x512xf32> to vector<8x512xf32>
    %18 = vector.shape_cast %15 : vector<8x512xf32> to vector<1x8x512xf32>
    tpu.vector_store %arg6[%c0_11, %c0_12, %c0_13], %18 {strides = array<i32>} : memref<1x8x1024xf32, #tpu.memory_space<vmem>>, vector<1x8x512xf32>,
    %c0_14 = arith.constant 0 : index
    %c0_15 = arith.constant 0 : index
    %c128 = arith.constant 128 : index
    %19 = vector.load %arg2[%c0_14, %c0_15, %c128] : memref<1x4x256xf32, #tpu.memory_space<vmem>>, vector<1x4x128xf32>
    %20 = vector.shape_cast %19 : vector<1x4x128xf32> to vector<4x128xf32>
    %21 = arith.truncf %20 : vector<4x128xf32> to vector<4x128xbf16>
    %cst_16 = arith.constant dense<0.000000e+00> : vector<8x128xf32>
    %22 = tpu.matmul %0, %21, %cst_16 {dimension_numbers = #tpu.dot_dimension_numbers<[1], [0], [0], [1], [0, 0, 1, 1], [], []>} : vector<8x4xbf16>, vector<4x128xbf16>, vector<8x128xf32> -> vector<8x128xf32>
    %23 = vector.broadcast %1 : vector<8x1xf32> to vector<8x128xf32>
    %24 = arith.addf %22, %23 : vector<8x128xf32>
    %cst_17 = arith.constant 0.000000e+00 : f32
    %25 = vector.broadcast %cst_17 : f32 to vector<8x128xf32>
    %26 = arith.cmpf ogt, %24, %25 : vector<8x128xf32>
    %cst_18 = arith.constant 0.00999999977 : f32
    %27 = vector.broadcast %cst_18 : f32 to vector<8x128xf32>
    %28 = arith.mulf %27, %24 : vector<8x128xf32>
    %29 = arith.select %26, %24, %28 : vector<8x128xi1>, vector<8x128xf32>
    %c0_19 = arith.constant 0 : index
    %c0_20 = arith.constant 0 : index
    %30 = vector.load %arg5[%c0_19, %c0_20] : memref<128x512xbf16, #tpu.memory_space<vmem>>, vector<128x512xbf16>
    %31 = arith.truncf %29 : vector<8x128xf32> to vector<8x128xbf16>
    %cst_21 = arith.constant dense<0.000000e+00> : vector<8x512xf32>
    %32 = tpu.matmul %31, %30, %cst_21 {dimension_numbers = #tpu.dot_dimension_numbers<[1], [0], [0], [1], [0, 0, 1, 1], [], []>} : vector<8x128xbf16>, vector<128x512xbf16>, vector<8x512xf32> -> vector<8x512xf32>
    %c0_22 = arith.constant 0 : index
    %c0_23 = arith.constant 0 : index
    %c512 = arith.constant 512 : index
    %33 = vector.load %arg6[%c0_22, %c0_23, %c512] : memref<1x8x1024xf32, #tpu.memory_space<vmem>>, vector<1x8x512xf32>
    %34 = vector.shape_cast %33 : vector<1x8x512xf32> to vector<8x512xf32>
    %35 = vector.shape_cast %32 : vector<8x512xf32> to vector<1x8x512xf32>
    tpu.vector_store %arg6[%c0_22, %c0_23, %c512], %35 {strides = array<i32>} : memref<1x8x1024xf32, #tpu.memory_space<vmem>>, vector<1x8x512xf32>,
    return
  }
  func.func @transform_0(%arg0: i32, %arg1: i32) -> (i32, i32, i32) {
    %c0_i32 = arith.constant 0 : i32
    %c0_i32_0 = arith.constant 0 : i32
    return %arg0, %c0_i32, %arg1 : i32, i32, i32
  }
  func.func @transform_1(%arg0: i32, %arg1: i32) -> (i32, i32) {
    %c0_i32 = arith.constant 0 : i32
    %c0_i32_0 = arith.constant 0 : i32
    %c0_i32_1 = arith.constant 0 : i32
    return %c0_i32, %c0_i32_0 : i32, i32
  }
  func.func @transform_2(%arg0: i32, %arg1: i32) -> (i32, i32) {
    %c0_i32 = arith.constant 0 : i32
    %c0_i32_0 = arith.constant 0 : i32
    %c0_i32_1 = arith.constant 0 : i32
    return %c0_i32, %c0_i32_0 : i32, i32
  }
  func.func @transform_3(%arg0: i32, %arg1: i32) -> (i32, i32) {
    %c0_i32 = arith.constant 0 : i32
    %c0_i32_0 = arith.constant 0 : i32
    %c0_i32_1 = arith.constant 0 : i32
    return %c0_i32, %c0_i32_0 : i32, i32
  }
  func.func @transform_4(%arg0: i32, %arg1: i32) -> (i32, i32, i32) {
    %c0_i32 = arith.constant 0 : i32
    %c0_i32_0 = arith.constant 0 : i32
    return %arg0, %c0_i32, %arg1 : i32, i32, i32
  }
}

</mosaic_0001>

<llo_original>
// kernel: tpu_custom_call.1
$region0: #{tpu_custom_call.1}
  #allocation0 [shape = 'u32[]', space=smem, size = 0x4, offset = 0x4, fixed_abs, tag = 'smem constant byte address 0x4 - core index']
  #allocation1 [shape = 'u32[144,128]{1,0:T(1,128)}', space=vmem, size = 0x12000, scoped, tag = 'internal scratch']
  %s0 = inlined_call_operand.hbm [shape: f32[2,4,256], index: 0, kind: input, shape index: {}]
  %s1 = inlined_call_operand.vmem [shape: bf16[8,4], index: 1, kind: input, shape index: {}]
  %s2 = inlined_call_operand.vmem [shape: f32[8,1], index: 2, kind: input, shape index: {}]
  %s3 = inlined_call_operand.hbm [shape: bf16[128,512], index: 3, kind: input, shape index: {}]
  %s4 = inlined_call_operand.hbm [shape: f32[2,8,1024], index: 4, kind: output, shape index: {}]
  %s5 = sld [smem:[#allocation0]]
  $region57: #{tpu_custom_call.1} parent=0
    _
  %s7 = ssub.s32 1, %s5
  %s8 = scalar_select 0, %s7, %s5
  $region1: #{tpu_custom_call.1} parent=0
    #allocation2 [shape = 'u8[8192]{0}', space=vmem, size = 0x2000, scoped, tag = 'input window, operand 0']
    #allocation3 [shape = 's32[2]{0}', space=sflag, size = 0x8, scoped, tag = 'scoped memory for tpu_custom_call.1']
    #allocation4 [shape = 's32[2]{0}', space=sflag, size = 0x8, scoped, tag = 'scoped memory for tpu_custom_call.1']
    #allocation5 [shape = 'u8[131072]{0}', space=vmem, size = 0x20000, scoped, tag = 'input window, operand 3, single buffered']
    #allocation6 [shape = 's32[1]{0}', space=sflag, size = 0x4, scoped, tag = 'scoped memory for tpu_custom_call.1']
    #allocation7 [shape = 'u8[65536]{0}', space=vmem, size = 0x10000, scoped, tag = 'output window, operand 0']
    %9 = vsyncpa [#allocation3], 0
    %s10 = scalar_lea.sflag [#allocation3], 1
    %11 = vsyncpa %s10, 0
    %12 = vsyncpa [#allocation6], 0
    %13 = vsyncpa [#allocation4], 0
    %s14 = scalar_lea.sflag [#allocation4], 1
    %15 = vsyncpa %s14, 0
    loop: start=0, step=1, limit=4
    $region2: #{tpu_custom_call.1} parent=1 // loop_pre_header
      _
    $region3: #{tpu_custom_call.1} parent=1 // loop_header
      %s17 = sphi 0, %s21
      %p18 = scmp.ge.s32.totalorder %s17, 4
      %s24 = sphi 0, %s36
      %s25 = sphi 0, %s32
      %s26 = sphi 0, %s24
      %s27 = sphi 0, %s25
      %s28 = sphi 0, %s26
      %s29 = sphi 0, %s27
      %s41 = sphi 0, %s43
      %s44 = sphi 0, %s41
      %s45 = sphi 0, %s44
      %s61 = sphi 0, %s45
      %s65 = sphi 0, %s65
      %s67 = sphi 0, %s65
      %s68 = sphi 0, %s67
      %s82 = sphi 0, %s68
      %s86 = sphi 0, %s86
      %s88 = sphi 0, %s86
      %s89 = sphi 0, %s88
      %s103 = sphi 0, %s89
      %s107 = sphi 0, %s107
      %s109 = sphi 0, %s107
      %s110 = sphi 0, %s109
      %s124 = sphi 0, %s110
      %s132 = sphi 0, %s134
      %s135 = sphi 0, %s132
      %s136 = sphi 0, %s135
      %s152 = sphi 0, %s136
    $region4: #{tpu_custom_call.1} parent=1 // loop_header_branch
      %20 = sbr.rel (%p18) target = $region8
    $region5: #{tpu_custom_call.1} parent=1 // loop_body
      %s22 = ssub.s32 %s17, 1
      %s23 = ssub.s32 %s17, 2
      %s30 = sadd.s32 1, %s25
      %p31 = scmp.ge.s32.totalorder %s30, 1
      %s32 = scalar_select %p31, 0, %s30
      %s33 = sadd.s32 1, %s24
      %s34 = scalar_select %p31, %s33, %s24
      %p35 = scmp.ge.s32.totalorder %s34, 2
      %s36 = scalar_select %p35, 0, %s34
      %s37 = ssub.s32 %s24, %s36
      %s38 = ssub.s32 %s25, %s32
      %s39 = sor.u32 %s37, %s38
      %p40 = scmp.eq.s32.totalorder %s39, 0
      %s42 = sadd.s32 %s41, 1
      %s43 = scalar_select %p40, %s41, %s42
      %p46 = pneg %p40
      %p47 = scmp.eq.s32.totalorder %s17, 1
      %p48 = por %p46, %p47
      %p49 = scmp.ne.s32.totalorder %s41, %s44
      %p50 = scmp.eq.s32.totalorder %s17, 0
      %p51 = por %p49, %p50
      %p52 = scmp.ne.s32.totalorder %s41, %s44
      %p53 = scmp.eq.s32.totalorder %s22, 1
      %p54 = por %p52, %p53
      %p55 = scmp.ne.s32.totalorder %s44, %s45
      %p56 = scmp.eq.s32.totalorder %s22, 0
      %p57 = por %p55, %p56
      %p58 = scmp.ne.s32.totalorder %s44, %s45
      %p59 = scmp.eq.s32.totalorder %s23, 1
      %p60 = por %p58, %p59
      %p62 = scmp.ne.s32.totalorder %s45, %s61
      %p63 = scmp.eq.s32.totalorder %s23, 0
      %p64 = por %p62, %p63
      %s66 = sadd.s32 %s65, 1
      %p69 = scmp.eq.s32.totalorder %s17, 1
      %p70 = scmp.ne.s32.totalorder %s65, %s67
      %p71 = scmp.eq.s32.totalorder %s17, 0
      %p72 = por %p70, %p71
      %p73 = scmp.ne.s32.totalorder %s65, %s67
      %p74 = scmp.eq.s32.totalorder %s22, 1
      %p75 = por %p73, %p74
      %p76 = scmp.ne.s32.totalorder %s67, %s68
      %p77 = scmp.eq.s32.totalorder %s22, 0
      %p78 = por %p76, %p77
      %p79 = scmp.ne.s32.totalorder %s67, %s68
      %p80 = scmp.eq.s32.totalorder %s23, 1
      %p81 = por %p79, %p80
      %p83 = scmp.ne.s32.totalorder %s68, %s82
      %p84 = scmp.eq.s32.totalorder %s23, 0
      %p85 = por %p83, %p84
      %s87 = sadd.s32 %s86, 1
      %p90 = scmp.eq.s32.totalorder %s17, 1
      %p91 = scmp.ne.s32.totalorder %s86, %s88
      %p92 = scmp.eq.s32.totalorder %s17, 0
      %p93 = por %p91, %p92
      %p94 = scmp.ne.s32.totalorder %s86, %s88
      %p95 = scmp.eq.s32.totalorder %s22, 1
      %p96 = por %p94, %p95
      %p97 = scmp.ne.s32.totalorder %s88, %s89
      %p98 = scmp.eq.s32.totalorder %s22, 0
      %p99 = por %p97, %p98
      %p100 = scmp.ne.s32.totalorder %s88, %s89
      %p101 = scmp.eq.s32.totalorder %s23, 1
      %p102 = por %p100, %p101
      %p104 = scmp.ne.s32.totalorder %s89, %s103
      %p105 = scmp.eq.s32.totalorder %s23, 0
      %p106 = por %p104, %p105
      %s108 = sadd.s32 %s107, 1
      %p111 = scmp.eq.s32.totalorder %s17, 1
      %p112 = scmp.ne.s32.totalorder %s107, %s109
      %p113 = scmp.eq.s32.totalorder %s17, 0
      %p114 = por %p112, %p113
      %p115 = scmp.ne.s32.totalorder %s107, %s109
      %p116 = scmp.eq.s32.totalorder %s22, 1
      %p117 = por %p115, %p116
      %p118 = scmp.ne.s32.totalorder %s109, %s110
      %p119 = scmp.eq.s32.totalorder %s22, 0
      %p120 = por %p118, %p119
      %p121 = scmp.ne.s32.totalorder %s109, %s110
      %p122 = scmp.eq.s32.totalorder %s23, 1
      %p123 = por %p121, %p122
      %p125 = scmp.ne.s32.totalorder %s110, %s124
      %p126 = scmp.eq.s32.totalorder %s23, 0
      %p127 = por %p125, %p126
      %s128 = ssub.s32 %s24, %s36
      %s129 = ssub.s32 %s25, %s32
      %s130 = sor.u32 %s128, %s129
      %p131 = scmp.eq.s32.totalorder %s130, 0
      %s133 = sadd.s32 %s132, 1
      %s134 = scalar_select %p131, %s132, %s133
      %p137 = pneg %p131
      %p138 = scmp.eq.s32.totalorder %s17, 1
      %p139 = por %p137, %p138
      %p140 = scmp.ne.s32.totalorder %s132, %s135
      %p141 = scmp.eq.s32.totalorder %s17, 0
      %p142 = por %p140, %p141
      %p143 = scmp.ne.s32.totalorder %s132, %s135
      %p144 = scmp.eq.s32.totalorder %s22, 1
      %p145 = por %p143, %p144
      %p146 = scmp.ne.s32.totalorder %s135, %s136
      %p147 = scmp.eq.s32.totalorder %s22, 0
      %p148 = por %p146, %p147
      %p149 = scmp.ne.s32.totalorder %s135, %s136
      %p150 = scmp.eq.s32.totalorder %s23, 1
      %p151 = por %p149, %p150
      %p153 = scmp.ne.s32.totalorder %s136, %s152
      %p154 = scmp.eq.s32.totalorder %s23, 0
      %p155 = por %p153, %p154
      %p156 = scmp.le.s32.totalorder 1, %s17
      %p157 = scmp.lt.s32.totalorder %s17, 3
      %p158 = pnand %p156, %p157
      %p159 = pneg %p158
      // Predicated region
      $region9: #{tpu_custom_call.1} parent=5 // pred_check
        _
      $region10: #{tpu_custom_call.1} parent=5 // pred_check_branch
        %161 = sbr.rel (%p158) target = $region12
      $region11: #{tpu_custom_call.1} parent=5 // pred_region
        %s162 = ssub.s32 %s17, 1
        // Predicated region
        $region13: #{tpu_custom_call.1} parent=11 // pred_check
          %p163 = pneg %p78
        $region14: #{tpu_custom_call.1} parent=11 // pred_check_branch
          %165 = sbr.rel (%p163) target = $region16
        $region15: #{tpu_custom_call.1} parent=11 // pred_region
          _
        $region16: #{tpu_custom_call.1} parent=11 // pred_fallthru
          _
        // Predicated region
        $region17: #{tpu_custom_call.1} parent=11 // pred_check
          %p166 = pneg %p99
        $region18: #{tpu_custom_call.1} parent=11 // pred_check_branch
          %168 = sbr.rel (%p166) target = $region20
        $region19: #{tpu_custom_call.1} parent=11 // pred_region
          _
        $region20: #{tpu_custom_call.1} parent=11 // pred_fallthru
          _
        // Predicated region
        $region21: #{tpu_custom_call.1} parent=11 // pred_check
          %p169 = pneg %p120
        $region22: #{tpu_custom_call.1} parent=11 // pred_check_branch
          %171 = sbr.rel (%p169) target = $region24
        $region23: #{tpu_custom_call.1} parent=11 // pred_region
          %s173 = ssub.s32 4096, 4096
          %174 = vsyncadd [#allocation6], %s173
          %s175 = sshll.u32 [#allocation5], 4
          %s176 = int_to_ptr.vmem [resolvable:$true] %s175
          %181 = dma.hbm_to_vmem [thread:$0]  %s3, 4096, %s176, [#allocation6], 256, 256, 16
        $region24: #{tpu_custom_call.1} parent=11 // pred_fallthru
          _
      $region12: #{tpu_custom_call.1} parent=5 // pred_fallthru
        _
      %p182 = scmp.lt.s32.totalorder %s17, 2
      // Predicated region
      $region25: #{tpu_custom_call.1} parent=5 // pred_check
        %p183 = pneg %p182
      $region26: #{tpu_custom_call.1} parent=5 // pred_check_branch
        %185 = sbr.rel (%p183) target = $region28
      $region27: #{tpu_custom_call.1} parent=5 // pred_region
        // Predicated region
        $region29: #{tpu_custom_call.1} parent=27 // pred_check
          %p186 = pneg %p51
        $region30: #{tpu_custom_call.1} parent=27 // pred_check_branch
          %188 = sbr.rel (%p186) target = $region32
        $region31: #{tpu_custom_call.1} parent=27 // pred_region
          %s189 = sand.u32 %s41, 1
          %s190 = scalar_lea.sflag [#allocation3], %s189
          %s191 = sand.u32 %s41, 1
          %s192 = smul.addr %s191, 8
          %s193 = scalar_lea.vmem [#allocation2], %s192
          %s194 = smul.u32 2, %s25
          %s196 = ssub.s32 128, 128
          %197 = vsyncadd %s190, %s196
          %s198 = smul.addr %s24, 2
          %s199 = sadd.s32 %s194, %s198
          %s200 = smul.addr %s199, 64
          %s201 = scalar_lea.hbm %s0, %s200
          %s203 = sshll.u32 %s193, 4
          %s204 = int_to_ptr.vmem [resolvable:$true] %s203
          %206 = dma.hbm_to_vmem [thread:$0]  %s201, 128, %s204, %s190
        $region32: #{tpu_custom_call.1} parent=27 // pred_fallthru
          _
      $region28: #{tpu_custom_call.1} parent=5 // pred_fallthru
        _
      %p207 = scmp.le.s32.totalorder 1, %s17
      %p208 = scmp.lt.s32.totalorder %s17, 3
      %p209 = pnand %p207, %p208
      %p210 = pneg %p209
      // Predicated region
      $region33: #{tpu_custom_call.1} parent=5 // pred_check
        _
      $region34: #{tpu_custom_call.1} parent=5 // pred_check_branch
        %212 = sbr.rel (%p209) target = $region36
      $region35: #{tpu_custom_call.1} parent=5 // pred_region
        %s213 = ssub.s32 %s17, 1
        %s214 = sand.u32 %s44, 1
        %s215 = scalar_lea.sflag [#allocation3], %s214
        %s216 = sand.u32 %s44, 1
        %s217 = smul.addr %s216, 8
        %s218 = scalar_lea.vmem [#allocation2], %s217
        // Predicated region
        $region37: #{tpu_custom_call.1} parent=35 // pred_check
          %p219 = pneg %p57
        $region38: #{tpu_custom_call.1} parent=35 // pred_check_branch
          %221 = sbr.rel (%p219) target = $region40
        $region39: #{tpu_custom_call.1} parent=35 // pred_region
          %222 = dma.done %s215, 128
        $region40: #{tpu_custom_call.1} parent=35 // pred_fallthru
          _
        // Predicated region
        $region41: #{tpu_custom_call.1} parent=35 // pred_check
          %p223 = pneg %p120
        $region42: #{tpu_custom_call.1} parent=35 // pred_check_branch
          %225 = sbr.rel (%p223) target = $region44
        $region43: #{tpu_custom_call.1} parent=35 // pred_region
          %226 = dma.done [#allocation6], 4096
        $region44: #{tpu_custom_call.1} parent=35 // pred_fallthru
          _
        %s227 = sand.u32 %s44, 1
        %s228 = scalar_lea.sflag [#allocation3], %s227
        %s229 = sand.u32 %s44, 1
        %s230 = smul.addr %s229, 8
        %s231 = scalar_lea.vmem [#allocation2], %s230
        %p232 = pneg %p57
        %p233 = pneg %p54
        %p234 = pneg %p78
        %p235 = pneg %p75
        %p236 = pneg %p99
        %p237 = pneg %p96
        %p238 = pneg %p120
        %p239 = pneg %p117
        %p240 = pneg %p148
        %p241 = pneg %p145
        %s242 = sand.u32 %s135, 1
        %s243 = scalar_lea.sflag [#allocation4], %s242
        %s244 = sand.u32 %s135, 1
        %s245 = smul.addr %s244, 64
        %s246 = scalar_lea.vmem [#allocation7], %s245
        %s247 = smul.u32 2, %s27
        %s248 = smul.u32 8, %s27
        %v250 = vld [vmem:[%s1] sm:$0xf]
        %v251 = vld [vmem:[%s2] sm:$0xff]
        %v252 = vld [vmem:[%s218] sm:$0xf]
        %v253 = vpack.c.bf16 %v252, %v252
        %255 = vset.pattern.permute.xlu0 0
        %256 = vperm.xlu0 %255, %v251
        %v257 = vpop.permute.xlu0 %256
        %vm259 = vcmask 31744
        %v261 = vsel %vm259, %v250, 0
        %vm263 = vcmask 1041408
        %v265 = vsel %vm263, %v253, 0
        %267 = vmatprep.subr.bf16.mxu0 0
        %268 = vmatpush1.bf16.msra.mxu0 %v265
        %269 = vmatprep.subr.bf16.mxu0 0
        %270 = vmatpush1.bf16.msra.mxu0 0
        %271 = vmatprep.subr.bf16.mxu0 0
        %272 = vmatpush1.bf16.msra.mxu0 0
        %273 = vmatprep.subr.bf16.mxu0 0
        %274 = vmatpush1.bf16.msra.mxu0 0
        %275 = vmatprep.subr.bf16.mxu0 0
        %276 = vmatpush1.bf16.msra.mxu0 0
        %277 = vmatprep.subr.bf16.mxu0 0
        %278 = vmatpush1.bf16.msra.mxu0 0
        %279 = vmatprep.subr.bf16.mxu0 0
        %280 = vmatpush1.bf16.msra.mxu0 0
        %281 = vmatprep.subr.bf16.mxu0 0
        %282 = vmatpush1.bf16.msra.mxu0 0
        %283 = vmatprep.subr.bf16.mxu0 0
        %284 = vmatpush1.bf16.msra.mxu0 0
        %285 = vmatprep.subr.bf16.mxu0 0
        %286 = vmatpush1.bf16.msra.mxu0 0
        %287 = vmatprep.subr.bf16.mxu0 0
        %288 = vmatpush1.bf16.msra.mxu0 0
        %289 = vmatprep.subr.bf16.mxu0 0
        %290 = vmatpush1.bf16.msra.mxu0 0
        %291 = vmatprep.subr.bf16.mxu0 0
        %292 = vmatpush1.bf16.msra.mxu0 0
        %293 = vmatprep.subr.bf16.mxu0 0
        %294 = vmatpush1.bf16.msra.mxu0 0
        %295 = vmatprep.subr.bf16.mxu0 0
        %296 = vmatpush1.bf16.msra.mxu0 0
        %297 = vmatprep.subr.bf16.mxu0 0
        %298 = vmatpush1.bf16.msra.mxu0 0
        %299 = vmatprep.mubr.bf16.mxu0 0
        %300 = vmatmul.mubr.bf16.gmra.mrb[0].mxu0 %v261
        %v301 = vpop.f32.mrb[0].mxu0
        %v302 = vadd.f32 %v257, %v301
        %v303 = vpop.f32.mrb[0].mxu0
        %v304 = vpop.f32.mrb[0].mxu0
        %v305 = vpop.f32.mrb[0].mxu0
        %306 = vdwg.mxu0
        %vm307 = vcmp.gt.f32.partialorder %v302, 0.0
        %v308 = vmul.f32 %v302, 0.01
        %v309 = vsel %vm307, %v302, %v308
        %v310 = vld [vmem:[#allocation5] sm:$0xff]
        %v311 = vld [vmem:[#allocation5 + $0x8] sm:$0xff]
        %v312 = vld [vmem:[#allocation5 + $0x10] sm:$0xff]
        %v313 = vld [vmem:[#allocation5 + $0x18] sm:$0xff]
        %v314 = vld [vmem:[#allocation5 + $0x20] sm:$0xff]
        %v315 = vld [vmem:[#allocation5 + $0x28] sm:$0xff]
        %v316 = vld [vmem:[#allocation5 + $0x30] sm:$0xff]
        %v317 = vld [vmem:[#allocation5 + $0x38] sm:$0xff]
        %v318 = vld [vmem:[#allocation5 + $0x40] sm:$0xff]
        %v319 = vld [vmem:[#allocation5 + $0x48] sm:$0xff]
        %v320 = vld [vmem:[#allocation5 + $0x50] sm:$0xff]
        %v321 = vld [vmem:[#allocation5 + $0x58] sm:$0xff]
        %v322 = vld [vmem:[#allocation5 + $0x60] sm:$0xff]
        %v323 = vld [vmem:[#allocation5 + $0x68] sm:$0xff]
        %v324 = vld [vmem:[#allocation5 + $0x70] sm:$0xff]
        %v325 = vld [vmem:[#allocation5 + $0x78] sm:$0xff]
        %v326 = vld [vmem:[#allocation5 + $0x80] sm:$0xff]
        %v327 = vld [vmem:[#allocation5 + $0x88] sm:$0xff]
        %v328 = vld [vmem:[#allocation5 + $0x90] sm:$0xff]
        %v329 = vld [vmem:[#allocation5 + $0x98] sm:$0xff]
        %v330 = vld [vmem:[#allocation5 + $0xa0] sm:$0xff]
        %v331 = vld [vmem:[#allocation5 + $0xa8] sm:$0xff]
        %v332 = vld [vmem:[#allocation5 + $0xb0] sm:$0xff]
        %v333 = vld [vmem:[#allocation5 + $0xb8] sm:$0xff]
        %v334 = vld [vmem:[#allocation5 + $0xc0] sm:$0xff]
        %v335 = vld [vmem:[#allocation5 + $0xc8] sm:$0xff]
        %v336 = vld [vmem:[#allocation5 + $0xd0] sm:$0xff]
        %v337 = vld [vmem:[#allocation5 + $0xd8] sm:$0xff]
        %v338 = vld [vmem:[#allocation5 + $0xe0] sm:$0xff]
        %v339 = vld [vmem:[#allocation5 + $0xe8] sm:$0xff]
        %v340 = vld [vmem:[#allocation5 + $0xf0] sm:$0xff]
        %v341 = vld [vmem:[#allocation5 + $0xf8] sm:$0xff]
        %v342 = vpack.c.bf16 %v309, %v309
        %v375 = vunpack.c.l.b16 %v310
        %v376 = vunpack.c.h.b16 %v310
        %v377 = vunpack.c.l.b16 %v311
        %v378 = vunpack.c.h.b16 %v311
        %v379 = vunpack.c.l.b16 %v312
        %v380 = vunpack.c.h.b16 %v312
        %v381 = vunpack.c.l.b16 %v313
        %v382 = vunpack.c.h.b16 %v313
        %v383 = vunpack.c.l.b16 %v314
        %v384 = vunpack.c.h.b16 %v314
        %v385 = vunpack.c.l.b16 %v315
        %v386 = vunpack.c.h.b16 %v315
        %v387 = vunpack.c.l.b16 %v316
        %v388 = vunpack.c.h.b16 %v316
        %v389 = vunpack.c.l.b16 %v317
        %v390 = vunpack.c.h.b16 %v317
        %v391 = vunpack.c.l.b16 %v318
        %v392 = vunpack.c.h.b16 %v318
        %v393 = vunpack.c.l.b16 %v319
        %v394 = vunpack.c.h.b16 %v319
        %v395 = vunpack.c.l.b16 %v320
        %v396 = vunpack.c.h.b16 %v320
        %v397 = vunpack.c.l.b16 %v321
        %v398 = vunpack.c.h.b16 %v321
        %v399 = vunpack.c.l.b16 %v322
        %v400 = vunpack.c.h.b16 %v322
        %v401 = vunpack.c.l.b16 %v323
        %v402 = vunpack.c.h.b16 %v323
        %v403 = vunpack.c.l.b16 %v324
        %v404 = vunpack.c.h.b16 %v324
        %v405 = vunpack.c.l.b16 %v325
        %v406 = vunpack.c.h.b16 %v325
        %v407 = vunpack.c.l.b16 %v326
        %v408 = vunpack.c.h.b16 %v326
        %v409 = vunpack.c.l.b16 %v327
        %v410 = vunpack.c.h.b16 %v327
        %v411 = vunpack.c.l.b16 %v328
        %v412 = vunpack.c.h.b16 %v328
        %v413 = vunpack.c.l.b16 %v329
        %v414 = vunpack.c.h.b16 %v329
        %v415 = vunpack.c.l.b16 %v330
        %v416 = vunpack.c.h.b16 %v330
        %v417 = vunpack.c.l.b16 %v331
        %v418 = vunpack.c.h.b16 %v331
        %v419 = vunpack.c.l.b16 %v332
        %v420 = vunpack.c.h.b16 %v332
        %v421 = vunpack.c.l.b16 %v333
        %v422 = vunpack.c.h.b16 %v333
        %v423 = vunpack.c.l.b16 %v334
        %v424 = vunpack.c.h.b16 %v334
        %v425 = vunpack.c.l.b16 %v335
        %v426 = vunpack.c.h.b16 %v335
        %v427 = vunpack.c.l.b16 %v336
        %v428 = vunpack.c.h.b16 %v336
        %v429 = vunpack.c.l.b16 %v337
        %v430 = vunpack.c.h.b16 %v337
        %v431 = vunpack.c.l.b16 %v338
        %v432 = vunpack.c.h.b16 %v338
        %v433 = vunpack.c.l.b16 %v339
        %v434 = vunpack.c.h.b16 %v339
        %v435 = vunpack.c.l.b16 %v340
        %v436 = vunpack.c.h.b16 %v340
        %v437 = vunpack.c.l.b16 %v341
        %v438 = vunpack.c.h.b16 %v341
        %v439 = vpack.c.b16 %v379, %v375
        %v440 = vpack.c.b16 %v380, %v376
        %v441 = vpack.c.b16 %v381, %v377
        %v442 = vpack.c.b16 %v382, %v378
        %v443 = vpack.c.b16 %v387, %v383
        %v444 = vpack.c.b16 %v388, %v384
        %v445 = vpack.c.b16 %v389, %v385
        %v446 = vpack.c.b16 %v390, %v386
        %v447 = vpack.c.b16 %v395, %v391
        %v448 = vpack.c.b16 %v396, %v392
        %v449 = vpack.c.b16 %v397, %v393
        %v450 = vpack.c.b16 %v398, %v394
        %v451 = vpack.c.b16 %v403, %v399
        %v452 = vpack.c.b16 %v404, %v400
        %v453 = vpack.c.b16 %v405, %v401
        %v454 = vpack.c.b16 %v406, %v402
        %v455 = vpack.c.b16 %v411, %v407
        %v456 = vpack.c.b16 %v412, %v408
        %v457 = vpack.c.b16 %v413, %v409
        %v458 = vpack.c.b16 %v414, %v410
        %v459 = vpack.c.b16 %v419, %v415
        %v460 = vpack.c.b16 %v420, %v416
        %v461 = vpack.c.b16 %v421, %v417
        %v462 = vpack.c.b16 %v422, %v418
        %v463 = vpack.c.b16 %v427, %v423
        %v464 = vpack.c.b16 %v428, %v424
        %v465 = vpack.c.b16 %v429, %v425
        %v466 = vpack.c.b16 %v430, %v426
        %v467 = vpack.c.b16 %v435, %v431
        %v468 = vpack.c.b16 %v436, %v432
        %v469 = vpack.c.b16 %v437, %v433
        %v470 = vpack.c.b16 %v438, %v434
        %503 = vmatprep.subr.bf16.mxu0 %v440
        %504 = vmatpush1.bf16.msra.mxu0 %v439
        %505 = vmatprep.subr.bf16.mxu0 %v444
        %506 = vmatpush1.bf16.msra.mxu0 %v443
        %507 = vmatprep.subr.bf16.mxu0 %v448
        %508 = vmatpush1.bf16.msra.mxu0 %v447
        %509 = vmatprep.subr.bf16.mxu0 %v452
        %510 = vmatpush1.bf16.msra.mxu0 %v451
        %511 = vmatprep.subr.bf16.mxu0 %v456
        %512 = vmatpush1.bf16.msra.mxu0 %v455
        %513 = vmatprep.subr.bf16.mxu0 %v460
        %514 = vmatpush1.bf16.msra.mxu0 %v459
        %515 = vmatprep.subr.bf16.mxu0 %v464
        %516 = vmatpush1.bf16.msra.mxu0 %v463
        %517 = vmatprep.subr.bf16.mxu0 %v468
        %518 = vmatpush1.bf16.msra.mxu0 %v467
        %519 = vmatprep.subr.bf16.mxu0 0
        %520 = vmatpush1.bf16.msra.mxu0 0
        %521 = vmatprep.subr.bf16.mxu0 0
        %522 = vmatpush1.bf16.msra.mxu0 0
        %523 = vmatprep.subr.bf16.mxu0 0
        %524 = vmatpush1.bf16.msra.mxu0 0
        %525 = vmatprep.subr.bf16.mxu0 0
        %526 = vmatpush1.bf16.msra.mxu0 0
        %527 = vmatprep.subr.bf16.mxu0 0
        %528 = vmatpush1.bf16.msra.mxu0 0
        %529 = vmatprep.subr.bf16.mxu0 0
        %530 = vmatpush1.bf16.msra.mxu0 0
        %531 = vmatprep.subr.bf16.mxu0 0
        %532 = vmatpush1.bf16.msra.mxu0 0
        %533 = vmatprep.subr.bf16.mxu0 0
        %534 = vmatpush1.bf16.msra.mxu0 0
        %535 = vmatprep.mubr.bf16.mxu0 0
        %536 = vmatmul.mubr.bf16.gmra.mrb[0].mxu0 %v342
        %v537 = vpop.f32.mrb[0].mxu0
        %v538 = vadd.f32 0.0, %v537
        %v539 = vpop.f32.mrb[0].mxu0
        %v540 = vadd.f32 0.0, %v539
        %v541 = vpop.f32.mrb[0].mxu0
        %v542 = vpop.f32.mrb[0].mxu0
        %543 = vdwg.mxu0
        %544 = vmatprep.subr.bf16.mxu0 %v442
        %545 = vmatpush1.bf16.msra.mxu0 %v441
        %546 = vmatprep.subr.bf16.mxu0 %v446
        %547 = vmatpush1.bf16.msra.mxu0 %v445
        %548 = vmatprep.subr.bf16.mxu0 %v450
        %549 = vmatpush1.bf16.msra.mxu0 %v449
        %550 = vmatprep.subr.bf16.mxu0 %v454
        %551 = vmatpush1.bf16.msra.mxu0 %v453
        %552 = vmatprep.subr.bf16.mxu0 %v458
        %553 = vmatpush1.bf16.msra.mxu0 %v457
        %554 = vmatprep.subr.bf16.mxu0 %v462
        %555 = vmatpush1.bf16.msra.mxu0 %v461
        %556 = vmatprep.subr.bf16.mxu0 %v466
        %557 = vmatpush1.bf16.msra.mxu0 %v465
        %558 = vmatprep.subr.bf16.mxu0 %v470
        %559 = vmatpush1.bf16.msra.mxu0 %v469
        %560 = vmatprep.subr.bf16.mxu0 0
        %561 = vmatpush1.bf16.msra.mxu0 0
        %562 = vmatprep.subr.bf16.mxu0 0
        %563 = vmatpush1.bf16.msra.mxu0 0
        %564 = vmatprep.subr.bf16.mxu0 0
        %565 = vmatpush1.bf16.msra.mxu0 0
        %566 = vmatprep.subr.bf16.mxu0 0
        %567 = vmatpush1.bf16.msra.mxu0 0
        %568 = vmatprep.subr.bf16.mxu0 0
        %569 = vmatpush1.bf16.msra.mxu0 0
        %570 = vmatprep.subr.bf16.mxu0 0
        %571 = vmatpush1.bf16.msra.mxu0 0
        %572 = vmatprep.subr.bf16.mxu0 0
        %573 = vmatpush1.bf16.msra.mxu0 0
        %574 = vmatprep.subr.bf16.mxu0 0
        %575 = vmatpush1.bf16.msra.mxu0 0
        %576 = vmatprep.mubr.bf16.mxu0 0
        %577 = vmatmul.mubr.bf16.gmra.mrb[0].mxu0 %v342
        %v578 = vpop.f32.mrb[0].mxu0
        %v579 = vadd.f32 0.0, %v578
        %v580 = vpop.f32.mrb[0].mxu0
        %v581 = vadd.f32 0.0, %v580
        %v582 = vpop.f32.mrb[0].mxu0
        %v583 = vpop.f32.mrb[0].mxu0
        %584 = vdwg.mxu0
        %585 = vst [vmem:[%s246] sm:$0xff] %v538
        %586 = vst [vmem:[%s246 + $0x8] sm:$0xff] %v540
        %587 = vst [vmem:[%s246 + $0x10] sm:$0xff] %v579
        %588 = vst [vmem:[%s246 + $0x18] sm:$0xff] %v581
        %v589 = vld [vmem:[%s218 + $0x4] sm:$0xf]
        %v590 = vpack.c.bf16 %v589, %v589
        %v592 = vsel %vm263, %v590, 0
        %594 = vmatprep.subr.bf16.mxu0 0
        %595 = vmatpush1.bf16.msra.mxu0 %v592
        %596 = vmatprep.subr.bf16.mxu0 0
        %597 = vmatpush1.bf16.msra.mxu0 0
        %598 = vmatprep.subr.bf16.mxu0 0
        %599 = vmatpush1.bf16.msra.mxu0 0
        %600 = vmatprep.subr.bf16.mxu0 0
        %601 = vmatpush1.bf16.msra.mxu0 0
        %602 = vmatprep.subr.bf16.mxu0 0
        %603 = vmatpush1.bf16.msra.mxu0 0
        %604 = vmatprep.subr.bf16.mxu0 0
        %605 = vmatpush1.bf16.msra.mxu0 0
        %606 = vmatprep.subr.bf16.mxu0 0
        %607 = vmatpush1.bf16.msra.mxu0 0
        %608 = vmatprep.subr.bf16.mxu0 0
        %609 = vmatpush1.bf16.msra.mxu0 0
        %610 = vmatprep.subr.bf16.mxu0 0
        %611 = vmatpush1.bf16.msra.mxu0 0
        %612 = vmatprep.subr.bf16.mxu0 0
        %613 = vmatpush1.bf16.msra.mxu0 0
        %614 = vmatprep.subr.bf16.mxu0 0
        %615 = vmatpush1.bf16.msra.mxu0 0
        %616 = vmatprep.subr.bf16.mxu0 0
        %617 = vmatpush1.bf16.msra.mxu0 0
        %618 = vmatprep.subr.bf16.mxu0 0
        %619 = vmatpush1.bf16.msra.mxu0 0
        %620 = vmatprep.subr.bf16.mxu0 0
        %621 = vmatpush1.bf16.msra.mxu0 0
        %622 = vmatprep.subr.bf16.mxu0 0
        %623 = vmatpush1.bf16.msra.mxu0 0
        %624 = vmatprep.subr.bf16.mxu0 0
        %625 = vmatpush1.bf16.msra.mxu0 0
        %626 = vmatprep.mubr.bf16.mxu0 0
        %627 = vmatmul.mubr.bf16.gmra.mrb[0].mxu0 %v261
        %v628 = vpop.f32.mrb[0].mxu0
        %v629 = vadd.f32 %v257, %v628
        %v630 = vpop.f32.mrb[0].mxu0
        %v631 = vpop.f32.mrb[0].mxu0
        %v632 = vpop.f32.mrb[0].mxu0
        %633 = vdwg.mxu0
        %vm634 = vcmp.gt.f32.partialorder %v629, 0.0
        %v635 = vmul.f32 %v629, 0.01
        %v636 = vsel %vm634, %v629, %v635
        %v637 = vld [vmem:[#allocation5] sm:$0xff]
        %v638 = vld [vmem:[#allocation5 + $0x8] sm:$0xff]
        %v639 = vld [vmem:[#allocation5 + $0x10] sm:$0xff]
        %v640 = vld [vmem:[#allocation5 + $0x18] sm:$0xff]
        %v641 = vld [vmem:[#allocation5 + $0x20] sm:$0xff]
        %v642 = vld [vmem:[#allocation5 + $0x28] sm:$0xff]
        %v643 = vld [vmem:[#allocation5 + $0x30] sm:$0xff]
        %v644 = vld [vmem:[#allocation5 + $0x38] sm:$0xff]
        %v645 = vld [vmem:[#allocation5 + $0x40] sm:$0xff]
        %v646 = vld [vmem:[#allocation5 + $0x48] sm:$0xff]
        %v647 = vld [vmem:[#allocation5 + $0x50] sm:$0xff]
        %v648 = vld [vmem:[#allocation5 + $0x58] sm:$0xff]
        %v649 = vld [vmem:[#allocation5 + $0x60] sm:$0xff]
        %v650 = vld [vmem:[#allocation5 + $0x68] sm:$0xff]
        %v651 = vld [vmem:[#allocation5 + $0x70] sm:$0xff]
        %v652 = vld [vmem:[#allocation5 + $0x78] sm:$0xff]
        %v653 = vld [vmem:[#allocation5 + $0x80] sm:$0xff]
        %v654 = vld [vmem:[#allocation5 + $0x88] sm:$0xff]
        %v655 = vld [vmem:[#allocation5 + $0x90] sm:$0xff]
        %v656 = vld [vmem:[#allocation5 + $0x98] sm:$0xff]
        %v657 = vld [vmem:[#allocation5 + $0xa0] sm:$0xff]
        %v658 = vld [vmem:[#allocation5 + $0xa8] sm:$0xff]
        %v659 = vld [vmem:[#allocation5 + $0xb0] sm:$0xff]
        %v660 = vld [vmem:[#allocation5 + $0xb8] sm:$0xff]
        %v661 = vld [vmem:[#allocation5 + $0xc0] sm:$0xff]
        %v662 = vld [vmem:[#allocation5 + $0xc8] sm:$0xff]
        %v663 = vld [vmem:[#allocation5 + $0xd0] sm:$0xff]
        %v664 = vld [vmem:[#allocation5 + $0xd8] sm:$0xff]
        %v665 = vld [vmem:[#allocation5 + $0xe0] sm:$0xff]
        %v666 = vld [vmem:[#allocation5 + $0xe8] sm:$0xff]
        %v667 = vld [vmem:[#allocation5 + $0xf0] sm:$0xff]
        %v668 = vld [vmem:[#allocation5 + $0xf8] sm:$0xff]
        %v669 = vpack.c.bf16 %v636, %v636
        %v702 = vunpack.c.l.b16 %v637
        %v703 = vunpack.c.h.b16 %v637
        %v704 = vunpack.c.l.b16 %v638
        %v705 = vunpack.c.h.b16 %v638
        %v706 = vunpack.c.l.b16 %v639
        %v707 = vunpack.c.h.b16 %v639
        %v708 = vunpack.c.l.b16 %v640
        %v709 = vunpack.c.h.b16 %v640
        %v710 = vunpack.c.l.b16 %v641
        %v711 = vunpack.c.h.b16 %v641
        %v712 = vunpack.c.l.b16 %v642
        %v713 = vunpack.c.h.b16 %v642
        %v714 = vunpack.c.l.b16 %v643
        %v715 = vunpack.c.h.b16 %v643
        %v716 = vunpack.c.l.b16 %v644
        %v717 = vunpack.c.h.b16 %v644
        %v718 = vunpack.c.l.b16 %v645
        %v719 = vunpack.c.h.b16 %v645
        %v720 = vunpack.c.l.b16 %v646
        %v721 = vunpack.c.h.b16 %v646
        %v722 = vunpack.c.l.b16 %v647
        %v723 = vunpack.c.h.b16 %v647
        %v724 = vunpack.c.l.b16 %v648
        %v725 = vunpack.c.h.b16 %v648
        %v726 = vunpack.c.l.b16 %v649
        %v727 = vunpack.c.h.b16 %v649
        %v728 = vunpack.c.l.b16 %v650
        %v729 = vunpack.c.h.b16 %v650
        %v730 = vunpack.c.l.b16 %v651
        %v731 = vunpack.c.h.b16 %v651
        %v732 = vunpack.c.l.b16 %v652
        %v733 = vunpack.c.h.b16 %v652
        %v734 = vunpack.c.l.b16 %v653
        %v735 = vunpack.c.h.b16 %v653
        %v736 = vunpack.c.l.b16 %v654
        %v737 = vunpack.c.h.b16 %v654
        %v738 = vunpack.c.l.b16 %v655
        %v739 = vunpack.c.h.b16 %v655
        %v740 = vunpack.c.l.b16 %v656
        %v741 = vunpack.c.h.b16 %v656
        %v742 = vunpack.c.l.b16 %v657
        %v743 = vunpack.c.h.b16 %v657
        %v744 = vunpack.c.l.b16 %v658
        %v745 = vunpack.c.h.b16 %v658
        %v746 = vunpack.c.l.b16 %v659
        %v747 = vunpack.c.h.b16 %v659
        %v748 = vunpack.c.l.b16 %v660
        %v749 = vunpack.c.h.b16 %v660
        %v750 = vunpack.c.l.b16 %v661
        %v751 = vunpack.c.h.b16 %v661
        %v752 = vunpack.c.l.b16 %v662
        %v753 = vunpack.c.h.b16 %v662
        %v754 = vunpack.c.l.b16 %v663
        %v755 = vunpack.c.h.b16 %v663
        %v756 = vunpack.c.l.b16 %v664
        %v757 = vunpack.c.h.b16 %v664
        %v758 = vunpack.c.l.b16 %v665
        %v759 = vunpack.c.h.b16 %v665
        %v760 = vunpack.c.l.b16 %v666
        %v761 = vunpack.c.h.b16 %v666
        %v762 = vunpack.c.l.b16 %v667
        %v763 = vunpack.c.h.b16 %v667
        %v764 = vunpack.c.l.b16 %v668
        %v765 = vunpack.c.h.b16 %v668
        %v766 = vpack.c.b16 %v706, %v702
        %v767 = vpack.c.b16 %v707, %v703
        %v768 = vpack.c.b16 %v708, %v704
        %v769 = vpack.c.b16 %v709, %v705
        %v770 = vpack.c.b16 %v714, %v710
        %v771 = vpack.c.b16 %v715, %v711
        %v772 = vpack.c.b16 %v716, %v712
        %v773 = vpack.c.b16 %v717, %v713
        %v774 = vpack.c.b16 %v722, %v718
        %v775 = vpack.c.b16 %v723, %v719
        %v776 = vpack.c.b16 %v724, %v720
        %v777 = vpack.c.b16 %v725, %v721
        %v778 = vpack.c.b16 %v730, %v726
        %v779 = vpack.c.b16 %v731, %v727
        %v780 = vpack.c.b16 %v732, %v728
        %v781 = vpack.c.b16 %v733, %v729
        %v782 = vpack.c.b16 %v738, %v734
        %v783 = vpack.c.b16 %v739, %v735
        %v784 = vpack.c.b16 %v740, %v736
        %v785 = vpack.c.b16 %v741, %v737
        %v786 = vpack.c.b16 %v746, %v742
        %v787 = vpack.c.b16 %v747, %v743
        %v788 = vpack.c.b16 %v748, %v744
        %v789 = vpack.c.b16 %v749, %v745
        %v790 = vpack.c.b16 %v754, %v750
        %v791 = vpack.c.b16 %v755, %v751
        %v792 = vpack.c.b16 %v756, %v752
        %v793 = vpack.c.b16 %v757, %v753
        %v794 = vpack.c.b16 %v762, %v758
        %v795 = vpack.c.b16 %v763, %v759
        %v796 = vpack.c.b16 %v764, %v760
        %v797 = vpack.c.b16 %v765, %v761
        %830 = vmatprep.subr.bf16.mxu0 %v767
        %831 = vmatpush1.bf16.msra.mxu0 %v766
        %832 = vmatprep.subr.bf16.mxu0 %v771
        %833 = vmatpush1.bf16.msra.mxu0 %v770
        %834 = vmatprep.subr.bf16.mxu0 %v775
        %835 = vmatpush1.bf16.msra.mxu0 %v774
        %836 = vmatprep.subr.bf16.mxu0 %v779
        %837 = vmatpush1.bf16.msra.mxu0 %v778
        %838 = vmatprep.subr.bf16.mxu0 %v783
        %839 = vmatpush1.bf16.msra.mxu0 %v782
        %840 = vmatprep.subr.bf16.mxu0 %v787
        %841 = vmatpush1.bf16.msra.mxu0 %v786
        %842 = vmatprep.subr.bf16.mxu0 %v791
        %843 = vmatpush1.bf16.msra.mxu0 %v790
        %844 = vmatprep.subr.bf16.mxu0 %v795
        %845 = vmatpush1.bf16.msra.mxu0 %v794
        %846 = vmatprep.subr.bf16.mxu0 0
        %847 = vmatpush1.bf16.msra.mxu0 0
        %848 = vmatprep.subr.bf16.mxu0 0
        %849 = vmatpush1.bf16.msra.mxu0 0
        %850 = vmatprep.subr.bf16.mxu0 0
        %851 = vmatpush1.bf16.msra.mxu0 0
        %852 = vmatprep.subr.bf16.mxu0 0
        %853 = vmatpush1.bf16.msra.mxu0 0
        %854 = vmatprep.subr.bf16.mxu0 0
        %855 = vmatpush1.bf16.msra.mxu0 0
        %856 = vmatprep.subr.bf16.mxu0 0
        %857 = vmatpush1.bf16.msra.mxu0 0
        %858 = vmatprep.subr.bf16.mxu0 0
        %859 = vmatpush1.bf16.msra.mxu0 0
        %860 = vmatprep.subr.bf16.mxu0 0
        %861 = vmatpush1.bf16.msra.mxu0 0
        %862 = vmatprep.mubr.bf16.mxu0 0
        %863 = vmatmul.mubr.bf16.gmra.mrb[0].mxu0 %v669
        %v864 = vpop.f32.mrb[0].mxu0
        %v865 = vadd.f32 0.0, %v864
        %v866 = vpop.f32.mrb[0].mxu0
        %v867 = vadd.f32 0.0, %v866
        %v868 = vpop.f32.mrb[0].mxu0
        %v869 = vpop.f32.mrb[0].mxu0
        %870 = vdwg.mxu0
        %871 = vmatprep.subr.bf16.mxu0 %v769
        %872 = vmatpush1.bf16.msra.mxu0 %v768
        %873 = vmatprep.subr.bf16.mxu0 %v773
        %874 = vmatpush1.bf16.msra.mxu0 %v772
        %875 = vmatprep.subr.bf16.mxu0 %v777
        %876 = vmatpush1.bf16.msra.mxu0 %v776
        %877 = vmatprep.subr.bf16.mxu0 %v781
        %878 = vmatpush1.bf16.msra.mxu0 %v780
        %879 = vmatprep.subr.bf16.mxu0 %v785
        %880 = vmatpush1.bf16.msra.mxu0 %v784
        %881 = vmatprep.subr.bf16.mxu0 %v789
        %882 = vmatpush1.bf16.msra.mxu0 %v788
        %883 = vmatprep.subr.bf16.mxu0 %v793
        %884 = vmatpush1.bf16.msra.mxu0 %v792
        %885 = vmatprep.subr.bf16.mxu0 %v797
        %886 = vmatpush1.bf16.msra.mxu0 %v796
        %887 = vmatprep.subr.bf16.mxu0 0
        %888 = vmatpush1.bf16.msra.mxu0 0
        %889 = vmatprep.subr.bf16.mxu0 0
        %890 = vmatpush1.bf16.msra.mxu0 0
        %891 = vmatprep.subr.bf16.mxu0 0
        %892 = vmatpush1.bf16.msra.mxu0 0
        %893 = vmatprep.subr.bf16.mxu0 0
        %894 = vmatpush1.bf16.msra.mxu0 0
        %895 = vmatprep.subr.bf16.mxu0 0
        %896 = vmatpush1.bf16.msra.mxu0 0
        %897 = vmatprep.subr.bf16.mxu0 0
        %898 = vmatpush1.bf16.msra.mxu0 0
        %899 = vmatprep.subr.bf16.mxu0 0
        %900 = vmatpush1.bf16.msra.mxu0 0
        %901 = vmatprep.subr.bf16.mxu0 0
        %902 = vmatpush1.bf16.msra.mxu0 0
        %903 = vmatprep.mubr.bf16.mxu0 0
        %904 = vmatmul.mubr.bf16.gmra.mrb[0].mxu0 %v669
        %v905 = vpop.f32.mrb[0].mxu0
        %v906 = vadd.f32 0.0, %v905
        %v907 = vpop.f32.mrb[0].mxu0
        %v908 = vadd.f32 0.0, %v907
        %v909 = vpop.f32.mrb[0].mxu0
        %v910 = vpop.f32.mrb[0].mxu0
        %911 = vdwg.mxu0
        %912 = vst [vmem:[%s246 + $0x20] sm:$0xff] %v865
        %913 = vst [vmem:[%s246 + $0x28] sm:$0xff] %v867
        %914 = vst [vmem:[%s246 + $0x30] sm:$0xff] %v906
        %915 = vst [vmem:[%s246 + $0x38] sm:$0xff] %v908
        %s916 = sand.u32 %s135, 1
        %s917 = scalar_lea.sflag [#allocation4], %s916
        %s918 = sand.u32 %s135, 1
        %s919 = smul.addr %s918, 64
        %s920 = scalar_lea.vmem [#allocation7], %s919
        // Predicated region
        $region45: #{tpu_custom_call.1} parent=35 // pred_check
          %p921 = pneg %p145
        $region46: #{tpu_custom_call.1} parent=35 // pred_check_branch
          %923 = sbr.rel (%p921) target = $region48
        $region47: #{tpu_custom_call.1} parent=35 // pred_region
          %s924 = smul.u32 8, %s27
          %s926 = ssub.s32 1024, 1024
          %927 = vsyncadd %s917, %s926
          %s928 = smul.addr %s26, 8
          %s929 = sadd.s32 %s924, %s928
          %s930 = smul.addr %s929, 128
          %s931 = scalar_lea.hbm %s4, %s930
          %s933 = sshll.u32 %s920, 4
          %s934 = int_to_ptr.vmem [resolvable:$true] %s933
          %936 = dma.vmem_to_hbm [thread:$0]  %s934, 1024, %s931, %s917
        $region48: #{tpu_custom_call.1} parent=35 // pred_fallthru
          _
      $region36: #{tpu_custom_call.1} parent=5 // pred_fallthru
        _
      %p937 = scmp.le.s32.totalorder 2, %s17
      // Predicated region
      $region49: #{tpu_custom_call.1} parent=5 // pred_check
        %p938 = pneg %p937
      $region50: #{tpu_custom_call.1} parent=5 // pred_check_branch
        %940 = sbr.rel (%p938) target = $region52
      $region51: #{tpu_custom_call.1} parent=5 // pred_region
        %s941 = ssub.s32 %s17, 2
        // Predicated region
        $region53: #{tpu_custom_call.1} parent=51 // pred_check
          %p942 = pneg %p151
        $region54: #{tpu_custom_call.1} parent=51 // pred_check_branch
          %944 = sbr.rel (%p942) target = $region56
        $region55: #{tpu_custom_call.1} parent=51 // pred_region
          %s945 = sand.u32 %s136, 1
          %s946 = scalar_lea.sflag [#allocation4], %s945
          %s947 = sand.u32 %s136, 1
          %s948 = smul.addr %s947, 64
          %s949 = scalar_lea.vmem [#allocation7], %s948
          %950 = dma.done %s946, 1024
        $region56: #{tpu_custom_call.1} parent=51 // pred_fallthru
          _
      $region52: #{tpu_custom_call.1} parent=5 // pred_fallthru
        _
    $region6: #{tpu_custom_call.1} parent=1 // loop_footer
      %s21 = sadd.s32 1, %s17
    $region7: #{tpu_custom_call.1} parent=1 // loop_footer_branch
      %16 = sbr.rel target = $region3
    $region8: #{tpu_custom_call.1} parent=1 // loop_exit
      _
    %951 = vsyncpa [#allocation3], 1
    %s952 = scalar_lea.sflag [#allocation3], 1
    %953 = vsyncpa %s952, 1
    %954 = vsyncpa [#allocation6], 1
    %955 = vsyncpa [#allocation4], 1
    %s956 = scalar_lea.sflag [#allocation4], 1
    %957 = vsyncpa %s956, 1

</llo_original>
